<compile_context>
chip_gen: v7x
topology: tpu7x:2x2x1
jax: 0.10.0
libtpu: 0.0.40
codegen_flags: <defaults>
</compile_context>

<pallas_src>
import math

import jax
import jax.numpy as jnp
from jax.experimental import pallas as pl
from jax.experimental.pallas import tpu as pltpu


def _num_tensorcores_per_chip() -> int:
    """2 on dual-TensorCore chips (v7x), else 1 (v5e / v6e are single-TC)."""
    try:
        kind = jax.devices()[0].device_kind.lower()
    except Exception:
        return 1
    return 2 if ("v7" in kind or "7x" in kind) else 1


def loss_sequence(expected, predicted, *, target_tile_bytes=8 << 20, num_shards=None):
    """Pallas implementation of LossSequence.forward(expected, predicted)."""
    assert expected.shape == predicted.shape
    B = expected.shape[0]
    N = 1
    for d in expected.shape[1:]:
        N *= d

    in_dtype = expected.dtype
    itemsize = jnp.dtype(in_dtype).itemsize

    # ---- small-B sublane folding: (B, N) -> (B*r, N/r) so rows fill the 8-sublane vreg.
    r = 1
    if B % 8 != 0:
        r_needed = 8 // math.gcd(B, 8)
        if N % r_needed == 0:
            r = r_needed
    rows = B * r
    n_eff = N // r

    e2d = expected.reshape(rows, n_eff)
    p2d = predicted.reshape(rows, n_eff)

    # ---- tiling ------------------------------------------------------------------
    lane_cols = ((n_eff + 127) // 128) * 128
    tm = rows if rows <= 512 else 512              # 512 is a multiple of 8 -> valid block dim
    row_tiles = pl.cdiv(rows, tm)

    tn = (target_tile_bytes // max(1, tm * itemsize)) // 128 * 128
    tn = int(max(128, min(tn, lane_cols)))

    # Guard scoped VMEM: 2 inputs x 2 pipeline buffers x (tm, tn) tiles + tiny outputs.
    vmem_budget = 40 << 20

    def _needed(tn_):
        return 4 * tm * tn_ * itemsize + 6 * tm * 4 + (1 << 20)

    while tn > 128 and _needed(tn) > vmem_budget:
        tn -= 128
    vmem_limit = int(min(48 << 20, max(32 << 20, _needed(tn) + (2 << 20))))

    n_tiles = pl.cdiv(n_eff, tn)
    if num_shards is None:
        num_shards = _num_tensorcores_per_chip()
    shards = int(max(1, min(num_shards, n_tiles)))
    tiles_per_shard = pl.cdiv(n_tiles, shards)
    last_blk = n_tiles - 1

    # ---- kernel ------------------------------------------------------------------
    def kernel(e_ref, p_ref, se_ref, sp_ref, t_ref):
        s = pl.program_id(0)
        k = pl.program_id(2)

        @pl.when(k == 0)
        def _init():
            se_ref[...] = jnp.zeros_like(se_ref)
            sp_ref[...] = jnp.zeros_like(sp_ref)
            t_ref[...] = jnp.zeros_like(t_ref)

        e = e_ref[...].astype(jnp.float32)
        p = p_ref[...].astype(jnp.float32)

        # In-kernel tail masking (replaces the old wrapper-side jnp.pad HBM round-trip):
        # exp(finfo.min) underflows to exactly 0 and (e - p) == 0 on masked columns,
        # so they contribute nothing to any partial sum.
        col0 = (s * tiles_per_shard + k) * tn
        col = col0 + jax.lax.broadcasted_iota(jnp.int32, e.shape, 1)
        valid = col < n_eff
        neg = jnp.float32(jnp.finfo(jnp.float32).min)
        e = jnp.where(valid, e, neg)
        p = jnp.where(valid, p, neg)

        exp_e = jnp.exp(e)                         # EUP
        exp_p = jnp.exp(p)                         # EUP

        # Per-tile lane reduction (XLU, hidden under DMA) straight into the resident
        # (tm, 1) output blocks -> no full-width VMEM accumulators.
        se_ref[...] += jnp.sum(exp_e, axis=1, keepdims=True)
        sp_ref[...] += jnp.sum(exp_p, axis=1, keepdims=True)
        t_ref[...] += jnp.sum(exp_e * (e - p), axis=1, keepdims=True)

    in_spec = pl.BlockSpec(
        (tm, tn),
        lambda s, rr, k: (rr, jnp.minimum(s * tiles_per_shard + k, last_blk)))
    out_spec = pl.BlockSpec((None, tm, 1), lambda s, rr, k: (s, rr, 0))
    part_shape = jax.ShapeDtypeStruct((shards, rows, 1), jnp.float32)

    cost = pl.CostEstimate(
        flops=6 * B * N,
        transcendentals=2 * B * N,
        bytes_accessed=2 * B * N * itemsize + 3 * shards * rows * 4,
    )

    se_p, sp_p, t_p = pl.pallas_call(
        kernel,
        out_shape=(part_shape, part_shape, part_shape),
        grid_spec=pltpu.PrefetchScalarGridSpec(
            num_scalar_prefetch=0,
            grid=(shards, row_tiles, tiles_per_shard),
            in_specs=[in_spec, in_spec],
            out_specs=(out_spec, out_spec, out_spec),
        ),
        compiler_params=pltpu.CompilerParams(
            dimension_semantics=("parallel", "parallel", "arbitrary"),
            vmem_limit_bytes=vmem_limit,
        ),
        cost_estimate=cost,
    )(e2d, p2d)

    # ---- tiny scalar epilogue in JAX: combine shard / fold partials, finish the KL ----
    se = jnp.sum(se_p[..., 0], axis=0)             # (rows,)  sum_i exp(e_i)
    sp = jnp.sum(sp_p[..., 0], axis=0)             # (rows,)  sum_i exp(p_i)
    t = jnp.sum(t_p[..., 0], axis=0)               # (rows,)  sum_i exp(e_i)*(e_i - p_i)
    if r > 1:
        se = se.reshape(B, r).sum(axis=1)
        sp = sp.reshape(B, r).sum(axis=1)
        t = t.reshape(B, r).sum(axis=1)

    kl_rows = t / se + jnp.log(sp) - jnp.log(se)
    return jnp.sum(kl_rows) / B                    # KLDivLoss 'batchmean'


def _loss_sequence_ref(expected, predicted):
    """Pure-JAX reference mirroring the PyTorch module exactly."""
    def softmax_all(x):
        ex = jnp.exp(x)
        return ex / jnp.sum(ex, axis=(1, 2, 3, 4), keepdims=True)

    B = expected.shape[0]
    p_pred = softmax_all(predicted)
    p_exp = softmax_all(expected)
    kl = p_exp * (jnp.log(p_exp) - jnp.log(p_pred))
    return jnp.sum(kl) / B


if __name__ == "__main__":
    # Small 5D shapes consistent with the forward (softmax over dims 1..4):
    # (batch=2, channels=4, depth=2, height=8, width=16)
    key = jax.random.PRNGKey(0)
    k1, k2 = jax.random.split(key)
    shape = (2, 4, 2, 8, 16)
    expected = jax.random.normal(k1, shape, dtype=jnp.float32)
    predicted = jax.random.normal(k2, shape, dtype=jnp.float32)

    loss = loss_sequence(expected, predicted)
    loss = jax.block_until_ready(loss)

    ref = jax.block_until_ready(_loss_sequence_ref(expected, predicted))
    assert jnp.allclose(loss, ref, rtol=1e-4, atol=1e-5), (loss, ref)

    print("KERNEL_OK")
</pallas_src>

<mosaic_0001>
module attributes {stable_mosaic.version = 11 : i64} {
  func.func @kernel(%arg0: i32, %arg1: i32, %arg2: i32, %arg3: memref<8x256xf32, #tpu.memory_space<vmem>>, %arg4: memref<8x256xf32, #tpu.memory_space<vmem>>, %arg5: memref<1x8x1xf32, #tpu.memory_space<vmem>>, %arg6: memref<1x8x1xf32, #tpu.memory_space<vmem>>, %arg7: memref<1x8x1xf32, #tpu.memory_space<vmem>>) attributes {dimension_semantics = [#tpu.dimension_semantics<parallel>, #tpu.dimension_semantics<parallel>, #tpu.dimension_semantics<arbitrary>], iteration_bounds = array<i64: 1, 1, 1>, scalar_prefetch = 0 : i64, scratch_operands = 0 : i64, tpu.core_type = #tpu.core_type<tc>, window_params = [{transform_indices = @transform_0, window_bounds = array<i64: 8, 256>}, {transform_indices = @transform_1, window_bounds = array<i64: 8, 256>}, {transform_indices = @transform_2, window_bounds = array<i64: 1, 8, 1>}, {transform_indices = @transform_3, window_bounds = array<i64: 1, 8, 1>}, {transform_indices = @transform_4, window_bounds = array<i64: 1, 8, 1>}]} {
    %c0_i32 = arith.constant 0 : i32
    %0 = arith.cmpi eq, %arg2, %c0_i32 : i32
    %1 = arith.extui %0 : i1 to i32
    %c0_i32_0 = arith.constant 0 : i32
    %2 = arith.cmpi ne, %1, %c0_i32_0 : i32
    scf.if %2 {
      %cst_27 = arith.constant 0.000000e+00 : f32
      %45 = vector.broadcast %cst_27 : f32 to vector<8x1xf32>
      %c0_28 = arith.constant 0 : index
      %c0_29 = arith.constant 0 : index
      %c0_30 = arith.constant 0 : index
      %46 = vector.load %arg5[%c0_28, %c0_29, %c0_30] : memref<1x8x1xf32, #tpu.memory_space<vmem>>, vector<1x8x1xf32>
      %47 = vector.shape_cast %46 : vector<1x8x1xf32> to vector<8x1xf32>
      %48 = vector.shape_cast %45 : vector<8x1xf32> to vector<1x8x1xf32>
      tpu.vector_store %arg5[%c0_28, %c0_29, %c0_30], %48 {strides = array<i32>} : memref<1x8x1xf32, #tpu.memory_space<vmem>>, vector<1x8x1xf32>,
      %cst_31 = arith.constant 0.000000e+00 : f32
      %49 = vector.broadcast %cst_31 : f32 to vector<8x1xf32>
      %c0_32 = arith.constant 0 : index
      %c0_33 = arith.constant 0 : index
      %c0_34 = arith.constant 0 : index
      %50 = vector.load %arg6[%c0_32, %c0_33, %c0_34] : memref<1x8x1xf32, #tpu.memory_space<vmem>>, vector<1x8x1xf32>
      %51 = vector.shape_cast %50 : vector<1x8x1xf32> to vector<8x1xf32>
      %52 = vector.shape_cast %49 : vector<8x1xf32> to vector<1x8x1xf32>
      tpu.vector_store %arg6[%c0_32, %c0_33, %c0_34], %52 {strides = array<i32>} : memref<1x8x1xf32, #tpu.memory_space<vmem>>, vector<1x8x1xf32>,
      %cst_35 = arith.constant 0.000000e+00 : f32
      %53 = vector.broadcast %cst_35 : f32 to vector<8x1xf32>
      %c0_36 = arith.constant 0 : index
      %c0_37 = arith.constant 0 : index
      %c0_38 = arith.constant 0 : index
      %54 = vector.load %arg7[%c0_36, %c0_37, %c0_38] : memref<1x8x1xf32, #tpu.memory_space<vmem>>, vector<1x8x1xf32>
      %55 = vector.shape_cast %54 : vector<1x8x1xf32> to vector<8x1xf32>
      %56 = vector.shape_cast %53 : vector<8x1xf32> to vector<1x8x1xf32>
      tpu.vector_store %arg7[%c0_36, %c0_37, %c0_38], %56 {strides = array<i32>} : memref<1x8x1xf32, #tpu.memory_space<vmem>>, vector<1x8x1xf32>,
    } else {
    }
    %c0 = arith.constant 0 : index
    %c0_1 = arith.constant 0 : index
    %3 = vector.load %arg3[%c0, %c0_1] : memref<8x256xf32, #tpu.memory_space<vmem>>, vector<8x256xf32>
    %c0_2 = arith.constant 0 : index
    %c0_3 = arith.constant 0 : index
    %4 = vector.load %arg4[%c0_2, %c0_3] : memref<8x256xf32, #tpu.memory_space<vmem>>, vector<8x256xf32>
    %c1_i32 = arith.constant 1 : i32
    %5 = arith.muli %arg0, %c1_i32 : i32
    %6 = arith.addi %5, %arg2 : i32
    %c256_i32 = arith.constant 256 : i32
    %7 = arith.muli %6, %c256_i32 : i32
    %8 = tpu.iota {dimensions = array<i32: 1>} : vector<8x256xi32>
    %9 = vector.broadcast %7 : i32 to vector<8x256xi32>
    %10 = arith.addi %9, %8 : vector<8x256xi32>
    %c256_i32_4 = arith.constant 256 : i32
    %11 = vector.broadcast %c256_i32_4 : i32 to vector<8x256xi32>
    %12 = arith.cmpi slt, %10, %11 : vector<8x256xi32>
    %cst = arith.constant -3.40282347E+38 : f32
    %13 = vector.broadcast %cst : f32 to vector<8x256xf32>
    %14 = arith.select %12, %3, %13 : vector<8x256xi1>, vector<8x256xf32>
    %cst_5 = arith.constant -3.40282347E+38 : f32
    %15 = vector.broadcast %cst_5 : f32 to vector<8x256xf32>
    %16 = arith.select %12, %4, %15 : vector<8x256xi1>, vector<8x256xf32>
    %17 = math.exp %14 : vector<8x256xf32>
    %18 = math.exp %16 : vector<8x256xf32>
    %c0_6 = arith.constant 0 : index
    %c0_7 = arith.constant 0 : index
    %c0_8 = arith.constant 0 : index
    %19 = vector.load %arg5[%c0_6, %c0_7, %c0_8] : memref<1x8x1xf32, #tpu.memory_space<vmem>>, vector<1x8x1xf32>
    %20 = vector.shape_cast %19 : vector<1x8x1xf32> to vector<8x1xf32>
    %cst_9 = arith.constant dense<0.000000e+00> : vector<8xf32>
    %21 = vector.multi_reduction <add>, %17, %cst_9 [1] : vector<8x256xf32> to vector<8xf32>
    %22 = vector.shape_cast %21 : vector<8xf32> to vector<8x1xf32>
    %23 = arith.addf %20, %22 : vector<8x1xf32>
    %c0_10 = arith.constant 0 : index
    %c0_11 = arith.constant 0 : index
    %c0_12 = arith.constant 0 : index
    %24 = vector.load %arg5[%c0_10, %c0_11, %c0_12] : memref<1x8x1xf32, #tpu.memory_space<vmem>>, vector<1x8x1xf32>
    %25 = vector.shape_cast %24 : vector<1x8x1xf32> to vector<8x1xf32>
    %26 = vector.shape_cast %23 : vector<8x1xf32> to vector<1x8x1xf32>
    tpu.vector_store %arg5[%c0_10, %c0_11, %c0_12], %26 {strides = array<i32>} : memref<1x8x1xf32, #tpu.memory_space<vmem>>, vector<1x8x1xf32>,
    %c0_13 = arith.constant 0 : index
    %c0_14 = arith.constant 0 : index
    %c0_15 = arith.constant 0 : index
    %27 = vector.load %arg6[%c0_13, %c0_14, %c0_15] : memref<1x8x1xf32, #tpu.memory_space<vmem>>, vector<1x8x1xf32>
    %28 = vector.shape_cast %27 : vector<1x8x1xf32> to vector<8x1xf32>
    %cst_16 = arith.constant dense<0.000000e+00> : vector<8xf32>
    %29 = vector.multi_reduction <add>, %18, %cst_16 [1] : vector<8x256xf32> to vector<8xf32>
    %30 = vector.shape_cast %29 : vector<8xf32> to vector<8x1xf32>
    %31 = arith.addf %28, %30 : vector<8x1xf32>
    %c0_17 = arith.constant 0 : index
    %c0_18 = arith.constant 0 : index
    %c0_19 = arith.constant 0 : index
    %32 = vector.load %arg6[%c0_17, %c0_18, %c0_19] : memref<1x8x1xf32, #tpu.memory_space<vmem>>, vector<1x8x1xf32>
    %33 = vector.shape_cast %32 : vector<1x8x1xf32> to vector<8x1xf32>
    %34 = vector.shape_cast %31 : vector<8x1xf32> to vector<1x8x1xf32>
    tpu.vector_store %arg6[%c0_17, %c0_18, %c0_19], %34 {strides = array<i32>} : memref<1x8x1xf32, #tpu.memory_space<vmem>>, vector<1x8x1xf32>,
    %c0_20 = arith.constant 0 : index
    %c0_21 = arith.constant 0 : index
    %c0_22 = arith.constant 0 : index
    %35 = vector.load %arg7[%c0_20, %c0_21, %c0_22] : memref<1x8x1xf32, #tpu.memory_space<vmem>>, vector<1x8x1xf32>
    %36 = vector.shape_cast %35 : vector<1x8x1xf32> to vector<8x1xf32>
    %37 = arith.subf %14, %16 : vector<8x256xf32>
    %38 = arith.mulf %17, %37 : vector<8x256xf32>
    %cst_23 = arith.constant dense<0.000000e+00> : vector<8xf32>
    %39 = vector.multi_reduction <add>, %38, %cst_23 [1] : vector<8x256xf32> to vector<8xf32>
    %40 = vector.shape_cast %39 : vector<8xf32> to vector<8x1xf32>
    %41 = arith.addf %36, %40 : vector<8x1xf32>
    %c0_24 = arith.constant 0 : index
    %c0_25 = arith.constant 0 : index
    %c0_26 = arith.constant 0 : index
    %42 = vector.load %arg7[%c0_24, %c0_25, %c0_26] : memref<1x8x1xf32, #tpu.memory_space<vmem>>, vector<1x8x1xf32>
    %43 = vector.shape_cast %42 : vector<1x8x1xf32> to vector<8x1xf32>
    %44 = vector.shape_cast %41 : vector<8x1xf32> to vector<1x8x1xf32>
    tpu.vector_store %arg7[%c0_24, %c0_25, %c0_26], %44 {strides = array<i32>} : memref<1x8x1xf32, #tpu.memory_space<vmem>>, vector<1x8x1xf32>,
    return
  }
  func.func @transform_0(%arg0: i32, %arg1: i32, %arg2: i32) -> (i32, i32) {
    %c1_i32 = arith.constant 1 : i32
    %0 = arith.muli %arg0, %c1_i32 : i32
    %1 = arith.addi %0, %arg2 : i32
    %c0_i32 = arith.constant 0 : i32
    %2 = arith.minsi %1, %c0_i32 : i32
    %c0_i32_0 = arith.constant 0 : i32
    return %arg1, %2 : i32, i32
  }
  func.func @transform_1(%arg0: i32, %arg1: i32, %arg2: i32) -> (i32, i32) {
    %c1_i32 = arith.constant 1 : i32
    %0 = arith.muli %arg0, %c1_i32 : i32
    %1 = arith.addi %0, %arg2 : i32
    %c0_i32 = arith.constant 0 : i32
    %2 = arith.minsi %1, %c0_i32 : i32
    %c0_i32_0 = arith.constant 0 : i32
    return %arg1, %2 : i32, i32
  }
  func.func @transform_2(%arg0: i32, %arg1: i32, %arg2: i32) -> (i32, i32, i32) {
    %c0_i32 = arith.constant 0 : i32
    %c0_i32_0 = arith.constant 0 : i32
    return %arg0, %arg1, %c0_i32 : i32, i32, i32
  }
  func.func @transform_3(%arg0: i32, %arg1: i32, %arg2: i32) -> (i32, i32, i32) {
    %c0_i32 = arith.constant 0 : i32
    %c0_i32_0 = arith.constant 0 : i32
    return %arg0, %arg1, %c0_i32 : i32, i32, i32
  }
  func.func @transform_4(%arg0: i32, %arg1: i32, %arg2: i32) -> (i32, i32, i32) {
    %c0_i32 = arith.constant 0 : i32
    %c0_i32_0 = arith.constant 0 : i32
    return %arg0, %arg1, %c0_i32 : i32, i32, i32
  }
}

</mosaic_0001>

<llo_original>
// kernel: tpu_custom_call.1
$region0: #{tpu_custom_call.1}
  #allocation0 [shape = 'u32[]', space=smem, size = 0x4, offset = 0x4, fixed_abs, tag = 'smem constant byte address 0x4 - core index']
  #allocation1 [shape = 'u32[144,128]{1,0:T(1,128)}', space=vmem, size = 0x12000, scoped, tag = 'internal scratch']
  %s0 = inlined_call_operand.hbm [shape: f32[8,256], index: 0, kind: input, shape index: {}]
  %s1 = inlined_call_operand.hbm [shape: f32[8,256], index: 1, kind: input, shape index: {}]
  %s2 = inlined_call_operand.vmem [shape: f32[1,8,1], index: 2, kind: output, shape index: {0}]
  %s3 = inlined_call_operand.vmem [shape: f32[1,8,1], index: 3, kind: output, shape index: {1}]
  %s4 = inlined_call_operand.vmem [shape: f32[1,8,1], index: 4, kind: output, shape index: {2}]
  %5 = xla_tuple %s2, %s3, %s4
  %s6 = sld [smem:[#allocation0]]
  $region46: #{tpu_custom_call.1} parent=0
    _
  %s8 = ssub.s32 1, %s6
  %s9 = scalar_select 0, %s8, %s6
  $region1: #{tpu_custom_call.1} parent=0
    #allocation2 [shape = 'u8[8192]{0}', space=vmem, size = 0x2000, scoped, tag = 'input window, operand 0, single buffered']
    #allocation3 [shape = 's32[1]{0}', space=sflag, size = 0x4, scoped, tag = 'scoped memory for tpu_custom_call.1']
    #allocation4 [shape = 'u8[8192]{0}', space=vmem, size = 0x2000, scoped, tag = 'input window, operand 1, single buffered']
    #allocation5 [shape = 's32[1]{0}', space=sflag, size = 0x4, scoped, tag = 'scoped memory for tpu_custom_call.1']
    %10 = vsyncpa [#allocation3], 0
    %11 = vsyncpa [#allocation5], 0
    // Predicated region
    $region2: #{tpu_custom_call.1} parent=1 // pred_check
      _
    $region3: #{tpu_custom_call.1} parent=1 // pred_check_branch
      %13 = sbr.rel (0) target = $region5
    $region4: #{tpu_custom_call.1} parent=1 // pred_region
      %s14 = sadd.s32 0, 0
      %p15 = scmp.lt.s32.totalorder %s14, 0
      %s16 = scalar_select %p15, %s14, 0
      %s17 = smul.u32 2, %s16
      %s19 = ssub.s32 256, 256
      %20 = vsyncadd [#allocation3], %s19
      %s21 = smul.addr %s17, 128
      %s22 = scalar_lea.hbm %s0, %s21
      %s24 = sshll.u32 [#allocation2], 4
      %s25 = int_to_ptr.vmem [resolvable:$true] %s24
      %27 = dma.hbm_to_vmem [thread:$0]  %s22, 256, %s25, [#allocation3]
    $region5: #{tpu_custom_call.1} parent=1 // pred_fallthru
      _
    // Predicated region
    $region6: #{tpu_custom_call.1} parent=1 // pred_check
      _
    $region7: #{tpu_custom_call.1} parent=1 // pred_check_branch
      %29 = sbr.rel (0) target = $region9
    $region8: #{tpu_custom_call.1} parent=1 // pred_region
      %s30 = sadd.s32 0, 0
      %p31 = scmp.lt.s32.totalorder %s30, 0
      %s32 = scalar_select %p31, %s30, 0
      %s33 = smul.u32 2, %s32
      %s35 = ssub.s32 256, 256
      %36 = vsyncadd [#allocation5], %s35
      %s37 = smul.addr %s33, 128
      %s38 = scalar_lea.hbm %s1, %s37
      %s40 = sshll.u32 [#allocation4], 4
      %s41 = int_to_ptr.vmem [resolvable:$true] %s40
      %43 = dma.hbm_to_vmem [thread:$0]  %s38, 256, %s41, [#allocation5]
    $region9: #{tpu_custom_call.1} parent=1 // pred_fallthru
      _
    // Predicated region
    $region10: #{tpu_custom_call.1} parent=1 // pred_check
      _
    $region11: #{tpu_custom_call.1} parent=1 // pred_check_branch
      %45 = sbr.rel (0) target = $region13
    $region12: #{tpu_custom_call.1} parent=1 // pred_region
      %46 = dma.done [#allocation3], 256
    $region13: #{tpu_custom_call.1} parent=1 // pred_fallthru
      _
    // Predicated region
    $region14: #{tpu_custom_call.1} parent=1 // pred_check
      _
    $region15: #{tpu_custom_call.1} parent=1 // pred_check_branch
      %48 = sbr.rel (0) target = $region17
    $region16: #{tpu_custom_call.1} parent=1 // pred_region
      %49 = dma.done [#allocation5], 256
    $region17: #{tpu_custom_call.1} parent=1 // pred_fallthru
      _
    %s50 = sadd.s32 0, 0
    %p51 = scmp.lt.s32.totalorder %s50, 0
    %s52 = scalar_select %p51, %s50, 0
    %s53 = smul.u32 2, %s52
    %s54 = sadd.s32 0, 0
    %p55 = scmp.lt.s32.totalorder %s54, 0
    %s56 = scalar_select %p55, %s54, 0
    %s57 = smul.u32 2, %s56
    %p58 = scmp.eq.s32.totalorder 0, 0
    // Predicated region
    $region18: #{tpu_custom_call.1} parent=1 // pred_check
      %p59 = pneg %p58
    $region19: #{tpu_custom_call.1} parent=1 // pred_check_branch
      %61 = sbr.rel (%p59) target = $region21
    $region20: #{tpu_custom_call.1} parent=1 // pred_region
      %vm62 = vcmask 7168
      %63 = vst.msk [vmem:[%s2] sm:$0xff] %vm62, 0.0
      %64 = vst.msk [vmem:[%s3] sm:$0xff] %vm62, 0.0
      %65 = vst.msk [vmem:[%s4] sm:$0xff] %vm62, 0.0
    $region21: #{tpu_custom_call.1} parent=1 // pred_fallthru
      _
    %v66 = vld [vmem:[#allocation2] sm:$0xff]
    %v67 = vld [vmem:[#allocation2 + $0x8] sm:$0xff]
    %v68 = vld [vmem:[#allocation4] sm:$0xff]
    %v69 = vld [vmem:[#allocation4 + $0x8] sm:$0xff]
    %s70 = sadd.s32 0, 0
    %s71 = smul.u32 %s70, 256
    %v72 = vlaneseq
    %v73 = vand.u32 %v72, 127
    %v74 = vadd.s32 %v73, 128
    %v75 = vstv %s71
    %v76 = vadd.s32 %v75, %v73
    %v77 = vadd.s32 %v75, %v74
    %vm78 = vcmp.lt.s32.totalorder %v76, 256
    %vm79 = vcmp.lt.s32.totalorder %v77, 256
    %v80 = vsel %vm78, %v66, -3.4028235e+38
    %v81 = vsel %vm79, %v67, -3.4028235e+38
    %v82 = vsel %vm78, %v68, -3.4028235e+38
    %v83 = vsel %vm79, %v69, -3.4028235e+38
    %v84 = vmul.f32 %v80, 1.442695
    %v85 = vpow.pop %v84
    %v86 = vmul.f32 %v81, 1.442695
    %v87 = vpow.pop %v86
    %v88 = vmul.f32 %v82, 1.442695
    %v89 = vpow.pop %v88
    %v90 = vmul.f32 %v83, 1.442695
    %v91 = vpow.pop %v90
    %v92 = vld [vmem:[%s2] sm:$0xff]
    %v93 = vadd.f32 %v85, %v87
    %94 = vadd.xlane.f32.xlu0 %v93
    %v95 = vpop.xlane.xlu0 %94
    %v96 = vadd.f32 %v92, %v95
    %vm97 = vcmask 7168
    %98 = vst.msk [vmem:[%s2] sm:$0xff] %vm97, %v96
    %v99 = vld [vmem:[%s3] sm:$0xff]
    %v100 = vadd.f32 %v89, %v91
    %101 = vadd.xlane.f32.xlu0 %v100
    %v102 = vpop.xlane.xlu0 %101
    %v103 = vadd.f32 %v99, %v102
    %104 = vst.msk [vmem:[%s3] sm:$0xff] %vm97, %v103
    %v105 = vld [vmem:[%s4] sm:$0xff]
    %v106 = vsub.f32 %v80, %v82
    %v107 = vsub.f32 %v81, %v83
    %v108 = vmul.f32 %v85, %v106
    %v109 = vmul.f32 %v87, %v107
    %v110 = vadd.f32 %v108, %v109
    %111 = vadd.xlane.f32.xlu0 %v110
    %v112 = vpop.xlane.xlu0 %111
    %v113 = vadd.f32 %v105, %v112
    %114 = vst.msk [vmem:[%s4] sm:$0xff] %vm97, %v113
    // Predicated region
    $region22: #{tpu_custom_call.1} parent=1 // pred_check
      _
    $region23: #{tpu_custom_call.1} parent=1 // pred_check_branch
      %116 = sbr.rel (0) target = $region25
    $region24: #{tpu_custom_call.1} parent=1 // pred_region
      _
    $region25: #{tpu_custom_call.1} parent=1 // pred_fallthru
      _
    // Predicated region
    $region26: #{tpu_custom_call.1} parent=1 // pred_check
      _
    $region27: #{tpu_custom_call.1} parent=1 // pred_check_branch
      %118 = sbr.rel (0) target = $region29
    $region28: #{tpu_custom_call.1} parent=1 // pred_region
      _
    $region29: #{tpu_custom_call.1} parent=1 // pred_fallthru
      _
    // Predicated region
    $region30: #{tpu_custom_call.1} parent=1 // pred_check
      _
    $region31: #{tpu_custom_call.1} parent=1 // pred_check_branch
      %120 = sbr.rel (0) target = $region33
    $region32: #{tpu_custom_call.1} parent=1 // pred_region
      _
    $region33: #{tpu_custom_call.1} parent=1 // pred_fallthru
      _
    // Predicated region
    $region34: #{tpu_custom_call.1} parent=1 // pred_check
      _
    $region35: #{tpu_custom_call.1} parent=1 // pred_check_branch
      %122 = sbr.rel (0) target = $region37
    $region36: #{tpu_custom_call.1} parent=1 // pred_region
      _
    $region37: #{tpu_custom_call.1} parent=1 // pred_fallthru
      _
    // Predicated region
    $region38: #{tpu_custom_call.1} parent=1 // pred_check
      _
    $region39: #{tpu_custom_call.1} parent=1 // pred_check_branch
      %124 = sbr.rel (0) target = $region41
    $region40: #{tpu_custom_call.1} parent=1 // pred_region
      _
    $region41: #{tpu_custom_call.1} parent=1 // pred_fallthru
      _
    // Predicated region
    $region42: #{tpu_custom_call.1} parent=1 // pred_check
      _
    $region43: #{tpu_custom_call.1} parent=1 // pred_check_branch
      %126 = sbr.rel (0) target = $region45
    $region44: #{tpu_custom_call.1} parent=1 // pred_region
      _
    $region45: #{tpu_custom_call.1} parent=1 // pred_fallthru
      _
    %127 = vsyncpa [#allocation3], 1
    %128 = vsyncpa [#allocation5], 1

</llo_original>
